<compile_context>
chip_gen: v7x
topology: tpu7x:2x2x1
jax: 0.10.0
libtpu: 0.0.40
codegen_flags: <defaults>
</compile_context>

<pallas_src>
import jax
import jax.numpy as jnp
from jax import lax
from jax.experimental import pallas as pl
from jax.experimental.pallas import tpu as pltpu

_MIB = 1024 * 1024
_EPS = 1e-5


def _round_up(x, m):
    return ((x + m - 1) // m) * m


# ----------------------------------------------------------------------------------
# Kernels
# ----------------------------------------------------------------------------------
def _single_tile_kernel(p_true, p_pad, eps=_EPS):
    """grid = (batch,). Whole per-batch output fits one lane tile: no scratch needed."""
    inv_p = 1.0 / float(p_true)
    n_pad = float(p_pad - p_true)

    def kernel(p_ref, w_ref, o_ref):
        # (C_out, CKp) @ (CKp, P_pad) -> f32 conv result (MXU, f32 accumulation).
        acc = jnp.dot(w_ref[...], p_ref[...], preferred_element_type=jnp.float32)
        # Padded columns are exactly zero, so the sum only needs the true-P divisor.
        mean = jnp.sum(acc, axis=1, keepdims=True) * inv_p
        d = acc - mean
        # Centered variance; remove the n_pad * mean^2 contributed by the zero columns.
        ssq = jnp.sum(d * d, axis=1, keepdims=True) - n_pad * mean * mean
        var = jnp.maximum(ssq * inv_p, 0.0)
        inv_std = lax.rsqrt(var + eps)
        o_ref[...] = jnp.maximum(d * inv_std, 0.0).astype(o_ref.dtype)

    return kernel


def _multi_tile_kernel(n_pt, p_tile, p_true, p_pad, eps=_EPS):
    """grid = (batch, n_pt). Refs:
       p_ref  : (CKp, P_tile)  bf16 im2col patch tile (batch dim squeezed)
       w_ref  : (C_out, CKp)   bf16 flattened conv weight (resident)
       o_ref  : (C_out, P_pad) bf16 full per-batch output block, resident across t;
                conv tiles are stashed here directly (no separate conv scratch).
       sum_sc : (C_out, 1)     f32 running per-channel sum
    """
    inv_p = 1.0 / float(p_true)
    n_pad = float(p_pad - p_true)

    def kernel(p_ref, w_ref, o_ref, sum_sc):
        t = pl.program_id(1)

        @pl.when(t == 0)
        def _init():
            sum_sc[...] = jnp.zeros_like(sum_sc)

        # Convolution as one MXU matmul: (C_out, CKp) @ (CKp, P_tile).
        acc = jnp.dot(w_ref[...], p_ref[...], preferred_element_type=jnp.float32)
        sum_sc[...] += jnp.sum(acc, axis=1, keepdims=True)

        # Stash the conv tile straight into the resident output block (lane-aligned).
        off = pl.multiple_of(t * p_tile, 128)
        o_ref[:, pl.ds(off, p_tile)] = acc.astype(o_ref.dtype)

        @pl.when(t == n_pt - 1)
        def _finalize():
            mean = sum_sc[...] * inv_p                          # (C_out, 1), f32

            def ssq_body(ti, ssq):
                o = pl.multiple_of(ti * p_tile, 128)
                y = o_ref[:, pl.ds(o, p_tile)].astype(jnp.float32)
                d = y - mean
                return ssq + jnp.sum(d * d, axis=1, keepdims=True)

            ssq = lax.fori_loop(0, n_pt, ssq_body, jnp.zeros_like(mean))
            # Padded zero columns contributed exactly n_pad * mean^2; remove it.
            ssq = ssq - n_pad * mean * mean
            var = jnp.maximum(ssq * inv_p, 0.0)
            inv_std = lax.rsqrt(var + eps)

            @pl.loop(0, n_pt)
            def _norm(ti):
                o = pl.multiple_of(ti * p_tile, 128)
                y = o_ref[:, pl.ds(o, p_tile)].astype(jnp.float32)
                yn = jnp.maximum((y - mean) * inv_std, 0.0)
                o_ref[:, pl.ds(o, p_tile)] = yn.astype(o_ref.dtype)

    return kernel


# ----------------------------------------------------------------------------------
# Wrapper: im2col + generation-aware tiling plan + pallas_call
# ----------------------------------------------------------------------------------
def _im2col_reflect_stride2(x, k=3):
    """x: (N, C, H, W) -> patches (N, C*k*k, H_out*W_out), reflect pad=1, stride=2.
    CK ordering is C-major then (kh, kw), matching weight.reshape(C_out, C*k*k)."""
    n, c, h, w = x.shape
    stride = 2
    h_out = (h + 2 - k) // stride + 1
    w_out = (w + 2 - k) // stride + 1
    xp = jnp.pad(x, ((0, 0), (0, 0), (1, 1), (1, 1)), mode="reflect")
    taps = []
    for i in range(k):
        for j in range(k):
            taps.append(xp[:, :, i:i + stride * h_out:stride, j:j + stride * w_out:stride])
    patches = jnp.stack(taps, axis=2)                         # (N, C, K*K, H_out, W_out)
    return patches.reshape(n, c * k * k, h_out * w_out), h_out, w_out


def _plan_tiles(c_out, ck_pad, p, out_bytes):
    """Pick the lane tile and VMEM limit from the local chip's VMEM capacity."""
    try:
        vmem_cap = int(pltpu.get_tpu_info().vmem_capacity_bytes)
    except Exception:
        vmem_cap = 64 * _MIB                                   # conservative v7x-sized fallback
    budget = int(0.70 * vmem_cap)
    # Bigger lane tiles on 128-MiB parts (v5e/v6e) to amortize per-step overhead and
    # maximize DMA size; smaller default on 64-MiB v7x.  (Deeper pipelining via
    # pl.Buffered is a further option on 128-MiB parts if DMA remains exposed.)
    target = 8192 if vmem_cap >= 96 * _MIB else 2048

    def estimate(pt):
        pp = _round_up(p, pt)
        return (2 * c_out * pp * out_bytes                     # resident output (x2 buffers)
                + 2 * ck_pad * pt * 2                          # double-buffered bf16 patch tile
                + 2 * c_out * ck_pad * 2                       # bf16 weights
                + 2 * _MIB)                                    # stats scratch + compiler slack

    p_tile = min(target, _round_up(p, 128))
    while p_tile > 128 and estimate(p_tile) > budget:
        nxt = max(128, ((p_tile // 2) // 128) * 128)
        if nxt == p_tile:
            break
        p_tile = nxt
    p_pad = _round_up(p, p_tile)
    vmem_limit = int(min(vmem_cap - 2 * _MIB, max(2 * estimate(p_tile), 32 * _MIB)))
    return p_tile, p_pad, vmem_limit


def contracting_block(x, weight, *, out_dtype=jnp.bfloat16):
    """x: (N, C_in, H, W) f32.  weight: (C_out, C_in, 3, 3) f32.
    Conv bias is intentionally omitted: the non-affine InstanceNorm cancels it."""
    n, c_in, h, w = x.shape
    c_out, _, k, _ = weight.shape

    patches, h_out, w_out = _im2col_reflect_stride2(x, k)     # (N, CK, P) f32
    p = h_out * w_out
    ck = c_in * k * k
    ck_pad = _round_up(ck, 16)                                 # bf16 sublane pack only

    out_bytes = jnp.dtype(out_dtype).itemsize
    p_tile, p_pad, vmem_limit = _plan_tiles(c_out, ck_pad, p, out_bytes)
    n_pt = p_pad // p_tile

    # bf16 streams; contraction dim zero-padded to 16, lane dim zero-padded to the tile.
    patches = jnp.pad(patches, ((0, 0), (0, ck_pad - ck), (0, p_pad - p))).astype(jnp.bfloat16)
    w_mat = jnp.pad(weight.reshape(c_out, ck), ((0, 0), (0, ck_pad - ck))).astype(jnp.bfloat16)

    if n_pt == 1:
        out_ncp = pl.pallas_call(
            _single_tile_kernel(p, p_pad),
            out_shape=jax.ShapeDtypeStruct((n, c_out, p_pad), out_dtype),
            grid_spec=pltpu.PrefetchScalarGridSpec(
                num_scalar_prefetch=0,
                grid=(n,),
                in_specs=[
                    pl.BlockSpec((None, ck_pad, p_pad), lambda b: (b, 0, 0)),
                    pl.BlockSpec((c_out, ck_pad), lambda b: (0, 0)),
                ],
                out_specs=pl.BlockSpec((None, c_out, p_pad), lambda b: (b, 0, 0)),
            ),
            compiler_params=pltpu.CompilerParams(
                dimension_semantics=("parallel",),
                vmem_limit_bytes=vmem_limit,
            ),
        )(patches, w_mat)
    else:
        out_ncp = pl.pallas_call(
            _multi_tile_kernel(n_pt, p_tile, p, p_pad),
            out_shape=jax.ShapeDtypeStruct((n, c_out, p_pad), out_dtype),
            grid_spec=pltpu.PrefetchScalarGridSpec(
                num_scalar_prefetch=0,
                grid=(n, n_pt),
                in_specs=[
                    # patch tile: batch squeezed, P tiled on the lane axis
                    pl.BlockSpec((None, ck_pad, p_tile), lambda b, t: (b, 0, t)),
                    # weights: constant block index -> stays resident in VMEM
                    pl.BlockSpec((c_out, ck_pad), lambda b, t: (0, 0)),
                ],
                # full per-batch output block, resident across the t (reduction) axis
                out_specs=pl.BlockSpec((None, c_out, p_pad), lambda b, t: (b, 0, 0)),
                scratch_shapes=[pltpu.VMEM((c_out, 1), jnp.float32)],   # running sum
            ),
            compiler_params=pltpu.CompilerParams(
                dimension_semantics=("parallel", "arbitrary"),
                vmem_limit_bytes=vmem_limit,
            ),
        )(patches, w_mat)

    if p_pad != p:
        out_ncp = out_ncp[:, :, :p]
    # (N, C_out, P) -> (N, C_out, H_out, W_out): pure reshape, no transpose.
    return out_ncp.reshape(n, c_out, h_out, w_out)


# ----------------------------------------------------------------------------------
# Reference + test
# ----------------------------------------------------------------------------------
def _reference(x, weight, bias):
    """Pure-JAX reference of the PyTorch forward (bias included: it must cancel)."""
    xp = jnp.pad(x, ((0, 0), (0, 0), (1, 1), (1, 1)), mode="reflect")
    y = lax.conv_general_dilated(
        xp, weight, window_strides=(2, 2), padding="VALID",
        dimension_numbers=("NCHW", "OIHW", "NCHW"),
    ) + bias.reshape(1, -1, 1, 1)
    mean = jnp.mean(y, axis=(2, 3), keepdims=True)
    var = jnp.mean((y - mean) ** 2, axis=(2, 3), keepdims=True)
    yn = (y - mean) / jnp.sqrt(var + _EPS)
    return jnp.maximum(yn, 0.0)


if __name__ == "__main__":
    key = jax.random.PRNGKey(0)
    kx, kw, kb = jax.random.split(key, 3)

    N, C_IN, H, W = 2, 4, 16, 16
    C_OUT, K = 2 * C_IN, 3

    x = jax.random.normal(kx, (N, C_IN, H, W), dtype=jnp.float32)
    weight = jax.random.normal(kw, (C_OUT, C_IN, K, K), dtype=jnp.float32) * 0.1
    bias = jax.random.normal(kb, (C_OUT,), dtype=jnp.float32) * 0.1

    fwd = jax.jit(contracting_block)
    out = fwd(x, weight)                   # bias dropped: cancelled by InstanceNorm
    out = jax.block_until_ready(out)

    ref = _reference(x, weight, bias)
    assert out.shape == (N, C_OUT, H // 2, W // 2), out.shape
    out_f32 = out.astype(jnp.float32)
    max_err = float(jnp.max(jnp.abs(out_f32 - ref)))
    assert jnp.allclose(out_f32, ref, atol=3e-2, rtol=3e-2), max_err

    print("KERNEL_OK")
</pallas_src>

<mosaic_0001>
module attributes {stable_mosaic.version = 11 : i64} {
  func.func @kernel(%arg0: i32, %arg1: memref<1x48x128xbf16, #tpu.memory_space<vmem>>, %arg2: memref<8x48xbf16, #tpu.memory_space<vmem>>, %arg3: memref<1x8x128xbf16, #tpu.memory_space<vmem>>) attributes {dimension_semantics = [#tpu.dimension_semantics<parallel>], iteration_bounds = array<i64: 2>, scalar_prefetch = 0 : i64, scratch_operands = 0 : i64, tpu.core_type = #tpu.core_type<tc>, window_params = [{transform_indices = @transform_0, window_bounds = array<i64: 1, 48, 128>}, {pipeline_mode = #tpu.pipeline_mode<synchronous>, transform_indices = @transform_1, window_bounds = array<i64: 8, 48>}, {transform_indices = @transform_2, window_bounds = array<i64: 1, 8, 128>}]} {
    %c0 = arith.constant 0 : index
    %c0_0 = arith.constant 0 : index
    %0 = vector.load %arg2[%c0, %c0_0] : memref<8x48xbf16, #tpu.memory_space<vmem>>, vector<8x48xbf16>
    %c0_1 = arith.constant 0 : index
    %c0_2 = arith.constant 0 : index
    %c0_3 = arith.constant 0 : index
    %1 = vector.load %arg1[%c0_1, %c0_2, %c0_3] : memref<1x48x128xbf16, #tpu.memory_space<vmem>>, vector<1x48x128xbf16>
    %2 = vector.shape_cast %1 : vector<1x48x128xbf16> to vector<48x128xbf16>
    %cst = arith.constant dense<0.000000e+00> : vector<8x128xf32>
    %3 = tpu.matmul %0, %2, %cst {dimension_numbers = #tpu.dot_dimension_numbers<[1], [0], [0], [1], [0, 0, 1, 1], [], []>} : vector<8x48xbf16>, vector<48x128xbf16>, vector<8x128xf32> -> vector<8x128xf32>
    %cst_4 = arith.constant dense<0.000000e+00> : vector<8xf32>
    %4 = vector.multi_reduction <add>, %3, %cst_4 [1] : vector<8x128xf32> to vector<8xf32>
    %5 = vector.shape_cast %4 : vector<8xf32> to vector<8x1xf32>
    %cst_5 = arith.constant 1.562500e-02 : f32
    %6 = vector.broadcast %cst_5 : f32 to vector<8x1xf32>
    %7 = arith.mulf %5, %6 : vector<8x1xf32>
    %8 = vector.broadcast %7 : vector<8x1xf32> to vector<8x128xf32>
    %9 = arith.subf %3, %8 : vector<8x128xf32>
    %10 = arith.mulf %9, %9 : vector<8x128xf32>
    %cst_6 = arith.constant dense<0.000000e+00> : vector<8xf32>
    %11 = vector.multi_reduction <add>, %10, %cst_6 [1] : vector<8x128xf32> to vector<8xf32>
    %12 = vector.shape_cast %11 : vector<8xf32> to vector<8x1xf32>
    %cst_7 = arith.constant 6.400000e+01 : f32
    %13 = vector.broadcast %cst_7 : f32 to vector<8x1xf32>
    %14 = arith.mulf %13, %7 : vector<8x1xf32>
    %15 = arith.mulf %14, %7 : vector<8x1xf32>
    %16 = arith.subf %12, %15 : vector<8x1xf32>
    %cst_8 = arith.constant 1.562500e-02 : f32
    %17 = vector.broadcast %cst_8 : f32 to vector<8x1xf32>
    %18 = arith.mulf %16, %17 : vector<8x1xf32>
    %cst_9 = arith.constant 0.000000e+00 : f32
    %19 = vector.broadcast %cst_9 : f32 to vector<8x1xf32>
    %20 = arith.maximumf %18, %19 : vector<8x1xf32>
    %cst_10 = arith.constant 9.99999974E-6 : f32
    %21 = vector.broadcast %cst_10 : f32 to vector<8x1xf32>
    %22 = arith.addf %20, %21 : vector<8x1xf32>
    %23 = math.rsqrt %22 : vector<8x1xf32>
    %24 = vector.broadcast %23 : vector<8x1xf32> to vector<8x128xf32>
    %25 = arith.mulf %9, %24 : vector<8x128xf32>
    %cst_11 = arith.constant 0.000000e+00 : f32
    %26 = vector.broadcast %cst_11 : f32 to vector<8x128xf32>
    %27 = arith.maximumf %25, %26 : vector<8x128xf32>
    %28 = arith.truncf %27 : vector<8x128xf32> to vector<8x128xbf16>
    %c0_12 = arith.constant 0 : index
    %c0_13 = arith.constant 0 : index
    %c0_14 = arith.constant 0 : index
    %29 = vector.load %arg3[%c0_12, %c0_13, %c0_14] : memref<1x8x128xbf16, #tpu.memory_space<vmem>>, vector<1x8x128xbf16>
    %30 = vector.shape_cast %29 : vector<1x8x128xbf16> to vector<8x128xbf16>
    %31 = vector.shape_cast %28 : vector<8x128xbf16> to vector<1x8x128xbf16>
    tpu.vector_store %arg3[%c0_12, %c0_13, %c0_14], %31 {strides = array<i32>} : memref<1x8x128xbf16, #tpu.memory_space<vmem>>, vector<1x8x128xbf16>,
    return
  }
  func.func @transform_0(%arg0: i32) -> (i32, i32, i32) {
    %c0_i32 = arith.constant 0 : i32
    %c0_i32_0 = arith.constant 0 : i32
    %c0_i32_1 = arith.constant 0 : i32
    return %arg0, %c0_i32, %c0_i32_0 : i32, i32, i32
  }
  func.func @transform_1(%arg0: i32) -> (i32, i32) {
    %c0_i32 = arith.constant 0 : i32
    %c0_i32_0 = arith.constant 0 : i32
    %c0_i32_1 = arith.constant 0 : i32
    return %c0_i32, %c0_i32_0 : i32, i32
  }
  func.func @transform_2(%arg0: i32) -> (i32, i32, i32) {
    %c0_i32 = arith.constant 0 : i32
    %c0_i32_0 = arith.constant 0 : i32
    %c0_i32_1 = arith.constant 0 : i32
    return %arg0, %c0_i32, %c0_i32_0 : i32, i32, i32
  }
}

</mosaic_0001>

<llo_original>
// kernel: contracting_block.1
$region0: #{contracting_block.1}
  #allocation0 [shape = 'u32[]', space=smem, size = 0x4, offset = 0x4, fixed_abs, tag = 'smem constant byte address 0x4 - core index']
  #allocation1 [shape = 'u32[144,128]{1,0:T(1,128)}', space=vmem, size = 0x12000, scoped, tag = 'internal scratch']
  %s0 = inlined_call_operand.vmem [shape: bf16[2,48,128], index: 0, kind: input, shape index: {}]
  %s1 = inlined_call_operand.vmem [shape: bf16[8,48], index: 1, kind: input, shape index: {}]
  %s2 = inlined_call_operand.vmem [shape: bf16[2,8,128], index: 2, kind: output, shape index: {}]
  %s3 = sld [smem:[#allocation0]]
  $region41: #{contracting_block.1} parent=0
    _
  %s5 = ssub.s32 1, %s3
  %s6 = scalar_select 0, %s5, %s3
  loop: start=0, step=1, limit=4
  $region2: #{contracting_block.1} parent=0 // loop_pre_header
    _
  $region3: #{contracting_block.1} parent=0 // loop_header
    %s8 = sphi 0, %s12
    %p9 = scmp.ge.s32.totalorder %s8, 4
    %s18 = sphi 0, %s20
    %s21 = sphi 0, %s18
    %s22 = sphi 0, %s21
    %s38 = sphi 0, %s22
    %s42 = sphi 0, %s42
    %s44 = sphi 0, %s42
    %s45 = sphi 0, %s44
    %s59 = sphi 0, %s45
    %s65 = sphi 0, %s67
    %s68 = sphi 0, %s65
    %s69 = sphi 0, %s68
    %s85 = sphi 0, %s69
  $region4: #{contracting_block.1} parent=0 // loop_header_branch
    %11 = sbr.rel (%p9) target = $region8
  $region5: #{contracting_block.1} parent=0 // loop_body
    %s13 = ssub.s32 %s8, 1
    %s14 = ssub.s32 %s8, 2
    %s15 = sadd.s32 %s8, 1
    %s16 = ssub.s32 %s8, %s15
    %p17 = scmp.eq.s32.totalorder %s16, 0
    %s19 = sadd.s32 %s18, 1
    %s20 = scalar_select %p17, %s18, %s19
    %p23 = pneg %p17
    %p24 = scmp.eq.s32.totalorder %s8, 1
    %p25 = por %p23, %p24
    %p26 = scmp.ne.s32.totalorder %s18, %s21
    %p27 = scmp.eq.s32.totalorder %s8, 0
    %p28 = por %p26, %p27
    %p29 = scmp.ne.s32.totalorder %s18, %s21
    %p30 = scmp.eq.s32.totalorder %s13, 1
    %p31 = por %p29, %p30
    %p32 = scmp.ne.s32.totalorder %s21, %s22
    %p33 = scmp.eq.s32.totalorder %s13, 0
    %p34 = por %p32, %p33
    %p35 = scmp.ne.s32.totalorder %s21, %s22
    %p36 = scmp.eq.s32.totalorder %s14, 1
    %p37 = por %p35, %p36
    %p39 = scmp.ne.s32.totalorder %s22, %s38
    %p40 = scmp.eq.s32.totalorder %s14, 0
    %p41 = por %p39, %p40
    %s43 = sadd.s32 %s42, 1
    %p46 = scmp.eq.s32.totalorder %s8, 1
    %p47 = scmp.ne.s32.totalorder %s42, %s44
    %p48 = scmp.eq.s32.totalorder %s8, 0
    %p49 = por %p47, %p48
    %p50 = scmp.ne.s32.totalorder %s42, %s44
    %p51 = scmp.eq.s32.totalorder %s13, 1
    %p52 = por %p50, %p51
    %p53 = scmp.ne.s32.totalorder %s44, %s45
    %p54 = scmp.eq.s32.totalorder %s13, 0
    %p55 = por %p53, %p54
    %p56 = scmp.ne.s32.totalorder %s44, %s45
    %p57 = scmp.eq.s32.totalorder %s14, 1
    %p58 = por %p56, %p57
    %p60 = scmp.ne.s32.totalorder %s45, %s59
    %p61 = scmp.eq.s32.totalorder %s14, 0
    %p62 = por %p60, %p61
    %s63 = ssub.s32 %s8, %s15
    %p64 = scmp.eq.s32.totalorder %s63, 0
    %s66 = sadd.s32 %s65, 1
    %s67 = scalar_select %p64, %s65, %s66
    %p70 = pneg %p64
    %p71 = scmp.eq.s32.totalorder %s8, 1
    %p72 = por %p70, %p71
    %p73 = scmp.ne.s32.totalorder %s65, %s68
    %p74 = scmp.eq.s32.totalorder %s8, 0
    %p75 = por %p73, %p74
    %p76 = scmp.ne.s32.totalorder %s65, %s68
    %p77 = scmp.eq.s32.totalorder %s13, 1
    %p78 = por %p76, %p77
    %p79 = scmp.ne.s32.totalorder %s68, %s69
    %p80 = scmp.eq.s32.totalorder %s13, 0
    %p81 = por %p79, %p80
    %p82 = scmp.ne.s32.totalorder %s68, %s69
    %p83 = scmp.eq.s32.totalorder %s14, 1
    %p84 = por %p82, %p83
    %p86 = scmp.ne.s32.totalorder %s69, %s85
    %p87 = scmp.eq.s32.totalorder %s14, 0
    %p88 = por %p86, %p87
    %p89 = scmp.le.s32.totalorder 1, %s8
    %p90 = scmp.lt.s32.totalorder %s8, 3
    %p91 = pnand %p89, %p90
    %p92 = pneg %p91
    // Predicated region
    $region9: #{contracting_block.1} parent=5 // pred_check
      _
    $region10: #{contracting_block.1} parent=5 // pred_check_branch
      %94 = sbr.rel (%p91) target = $region12
    $region11: #{contracting_block.1} parent=5 // pred_region
      %s95 = ssub.s32 %s8, 1
      // Predicated region
      $region13: #{contracting_block.1} parent=11 // pred_check
        %p96 = pneg %p55
      $region14: #{contracting_block.1} parent=11 // pred_check_branch
        %98 = sbr.rel (%p96) target = $region16
      $region15: #{contracting_block.1} parent=11 // pred_region
        _
      $region16: #{contracting_block.1} parent=11 // pred_fallthru
        _
    $region12: #{contracting_block.1} parent=5 // pred_fallthru
      _
    %p99 = scmp.lt.s32.totalorder %s8, 2
    // Predicated region
    $region17: #{contracting_block.1} parent=5 // pred_check
      %p100 = pneg %p99
    $region18: #{contracting_block.1} parent=5 // pred_check_branch
      %102 = sbr.rel (%p100) target = $region20
    $region19: #{contracting_block.1} parent=5 // pred_region
      // Predicated region
      $region21: #{contracting_block.1} parent=19 // pred_check
        %p103 = pneg %p28
      $region22: #{contracting_block.1} parent=19 // pred_check_branch
        %105 = sbr.rel (%p103) target = $region24
      $region23: #{contracting_block.1} parent=19 // pred_region
        %p106 = scmp.lt.s32.totalorder %s8, 1
        %s107 = scalar_select %p106, %s8, 1
        %s108 = smul.addr %s107, 6
        %s109 = smul.addr %s108, 4
        %s110 = scalar_lea.vmem %s0, %s109
      $region24: #{contracting_block.1} parent=19 // pred_fallthru
        _
    $region20: #{contracting_block.1} parent=5 // pred_fallthru
      _
    %p111 = scmp.le.s32.totalorder 1, %s8
    %p112 = scmp.lt.s32.totalorder %s8, 3
    %p113 = pnand %p111, %p112
    %p114 = pneg %p113
    // Predicated region
    $region25: #{contracting_block.1} parent=5 // pred_check
      _
    $region26: #{contracting_block.1} parent=5 // pred_check_branch
      %116 = sbr.rel (%p113) target = $region28
    $region27: #{contracting_block.1} parent=5 // pred_region
      %s117 = ssub.s32 %s8, 1
      %p118 = scmp.lt.s32.totalorder %s13, 1
      %s119 = scalar_select %p118, %s13, 1
      %s120 = smul.addr %s119, 6
      %s121 = smul.addr %s120, 4
      %s122 = scalar_lea.vmem %s0, %s121
      %p123 = pneg %p34
      %p124 = pneg %p31
      %p125 = pneg %p55
      %p126 = pneg %p52
      %p127 = pneg %p81
      %p128 = pneg %p78
      %p129 = scmp.lt.s32.totalorder %s13, 1
      %s130 = scalar_select %p129, %s13, 1
      %s131 = smul.addr %s130, 4
      %s132 = scalar_lea.vmem %s2, %s131
      %p133 = scmp.lt.s32.totalorder %s13, 1
      %s134 = scalar_select %p133, %s13, 1
      %s135 = smul.addr %s134, 6
      %s136 = smul.addr %s135, 4
      %s137 = scalar_lea.vmem %s0, %s136
      %p138 = scmp.lt.s32.totalorder %s13, 1
      %s139 = scalar_select %p138, %s13, 1
      %s140 = smul.addr %s139, 4
      %s141 = scalar_lea.vmem %s2, %s140
      %v143 = vld [vmem:[%s1] sm:$0xf]
      %v144 = vld [vmem:[%s137] sm:$0xf]
      %v145 = vld [vmem:[%s137 + $0x4] sm:$0xf]
      %v146 = vld [vmem:[%s137 + $0x8] sm:$0xf]
      %v147 = vld [vmem:[%s137 + $0xc] sm:$0xf]
      %v148 = vld [vmem:[%s137 + $0x10] sm:$0xf]
      %v149 = vld [vmem:[%s137 + $0x14] sm:$0xf]
      %v156 = vunpack.c.l.b16 %v144
      %v157 = vunpack.c.l.b16 %v145
      %v158 = vunpack.c.l.b16 %v146
      %v159 = vunpack.c.l.b16 %v147
      %v160 = vunpack.c.l.b16 %v148
      %v161 = vunpack.c.l.b16 %v149
      %v162 = vpack.c.b16 %v157, %v156
      %v163 = vpack.c.b16 %v159, %v158
      %v164 = vpack.c.b16 %v161, %v160
      %vm168 = vcmask 392192
      %v170 = vsel %vm168, %v143, 0
      %172 = vmatprep.subr.bf16.mxu0 0
      %173 = vmatpush1.bf16.msra.mxu0 %v162
      %174 = vmatprep.subr.bf16.mxu0 0
      %175 = vmatpush1.bf16.msra.mxu0 %v163
      %176 = vmatprep.subr.bf16.mxu0 0
      %177 = vmatpush1.bf16.msra.mxu0 %v164
      %178 = vmatprep.subr.bf16.mxu0 0
      %179 = vmatpush1.bf16.msra.mxu0 0
      %180 = vmatprep.subr.bf16.mxu0 0
      %181 = vmatpush1.bf16.msra.mxu0 0
      %182 = vmatprep.subr.bf16.mxu0 0
      %183 = vmatpush1.bf16.msra.mxu0 0
      %184 = vmatprep.subr.bf16.mxu0 0
      %185 = vmatpush1.bf16.msra.mxu0 0
      %186 = vmatprep.subr.bf16.mxu0 0
      %187 = vmatpush1.bf16.msra.mxu0 0
      %188 = vmatprep.subr.bf16.mxu0 0
      %189 = vmatpush1.bf16.msra.mxu0 0
      %190 = vmatprep.subr.bf16.mxu0 0
      %191 = vmatpush1.bf16.msra.mxu0 0
      %192 = vmatprep.subr.bf16.mxu0 0
      %193 = vmatpush1.bf16.msra.mxu0 0
      %194 = vmatprep.subr.bf16.mxu0 0
      %195 = vmatpush1.bf16.msra.mxu0 0
      %196 = vmatprep.subr.bf16.mxu0 0
      %197 = vmatpush1.bf16.msra.mxu0 0
      %198 = vmatprep.subr.bf16.mxu0 0
      %199 = vmatpush1.bf16.msra.mxu0 0
      %200 = vmatprep.subr.bf16.mxu0 0
      %201 = vmatpush1.bf16.msra.mxu0 0
      %202 = vmatprep.subr.bf16.mxu0 0
      %203 = vmatpush1.bf16.msra.mxu0 0
      %204 = vmatprep.mubr.bf16.mxu0 0
      %205 = vmatmul.mubr.bf16.gmra.mrb[0].mxu0 %v170
      %v206 = vpop.f32.mrb[0].mxu0
      %v207 = vadd.f32 0.0, %v206
      %v208 = vpop.f32.mrb[0].mxu0
      %v209 = vpop.f32.mrb[0].mxu0
      %v210 = vpop.f32.mrb[0].mxu0
      %211 = vdwg.mxu0
      %212 = vadd.xlane.f32.xlu0 %v207
      %v213 = vpop.xlane.xlu0 %212
      %v214 = vmul.f32 %v213, 0.015625
      %v215 = vsub.f32 %v207, %v214
      %v216 = vmul.f32 %v215, %v215
      %217 = vadd.xlane.f32.xlu0 %v216
      %v218 = vpop.xlane.xlu0 %217
      %v219 = vmul.f32 %v214, 64.0
      %v220 = vmul.f32 %v219, %v214
      %v221 = vsub.f32 %v218, %v220
      %v222 = vmul.f32 %v221, 0.015625
      %v223 = vmax.f32 %v222, 0.0
      %v224 = vadd.f32 %v223, 1e-05
      %v225 = vrsqrt.pop %v224
      %v226 = vmul.f32 %v215, %v225
      %v227 = vmax.f32 %v226, 0.0
      %v228 = vpack.c.bf16 %v227, %v227
      %229 = vst [vmem:[%s141] sm:$0xf] %v228
      %p230 = scmp.lt.s32.totalorder %s13, 1
      %s231 = scalar_select %p230, %s13, 1
      %s232 = smul.addr %s231, 4
      %s233 = scalar_lea.vmem %s2, %s232
      // Predicated region
      $region29: #{contracting_block.1} parent=27 // pred_check
        %p234 = pneg %p78
      $region30: #{contracting_block.1} parent=27 // pred_check_branch
        %236 = sbr.rel (%p234) target = $region32
      $region31: #{contracting_block.1} parent=27 // pred_region
        _
      $region32: #{contracting_block.1} parent=27 // pred_fallthru
        _
    $region28: #{contracting_block.1} parent=5 // pred_fallthru
      _
    %p237 = scmp.le.s32.totalorder 2, %s8
    // Predicated region
    $region33: #{contracting_block.1} parent=5 // pred_check
      %p238 = pneg %p237
    $region34: #{contracting_block.1} parent=5 // pred_check_branch
      %240 = sbr.rel (%p238) target = $region36
    $region35: #{contracting_block.1} parent=5 // pred_region
      %s241 = ssub.s32 %s8, 2
      // Predicated region
      $region37: #{contracting_block.1} parent=35 // pred_check
        %p242 = pneg %p84
      $region38: #{contracting_block.1} parent=35 // pred_check_branch
        %244 = sbr.rel (%p242) target = $region40
      $region39: #{contracting_block.1} parent=35 // pred_region
        %p245 = scmp.lt.s32.totalorder %s14, 1
        %s246 = scalar_select %p245, %s14, 1
        %s247 = smul.addr %s246, 4
        %s248 = scalar_lea.vmem %s2, %s247
      $region40: #{contracting_block.1} parent=35 // pred_fallthru
        _
    $region36: #{contracting_block.1} parent=5 // pred_fallthru
      _
  $region6: #{contracting_block.1} parent=0 // loop_footer
    %s12 = sadd.s32 1, %s8
  $region7: #{contracting_block.1} parent=0 // loop_footer_branch
    %7 = sbr.rel target = $region3
  $region8: #{contracting_block.1} parent=0 // loop_exit
    _

</llo_original>
